<compile_context>
chip_gen: v7x
topology: tpu7x:2x2x1
jax: 0.10.0
libtpu: 0.0.40
codegen_flags: <defaults>
</compile_context>

<pallas_src>
from functools import partial

import jax
import jax.numpy as jnp
from jax.experimental import pallas as pl
from jax.experimental.pallas import tpu as pltpu


# ---------------------------------------------------------------------------
# Kernel 1: tiled linear layer  out = x @ W + b   (qkv projection)
# ---------------------------------------------------------------------------
def _linear_kernel(x_ref, w_ref, b_ref, o_ref, acc_ref):
    @pl.when(pl.program_id(2) == 0)
    def _init():
        acc_ref[...] = jnp.zeros_like(acc_ref)

    acc_ref[...] += jnp.dot(
        x_ref[...], w_ref[...], preferred_element_type=jnp.float32
    )

    @pl.when(pl.program_id(2) == pl.num_programs(2) - 1)
    def _finalize():
        # bias is added exactly once, in the K-reduction epilogue
        o_ref[...] = (acc_ref[...] + b_ref[...]).astype(o_ref.dtype)


def _choose_tile(dim, target):
    """Largest MXU/lane-aligned tile <= target dividing dim; try 256/128 before
    collapsing to the full dimension (avoids full-M/full-K tiles on odd shapes)."""
    for cand in (target, 512, 256, 128):
        if cand <= target and dim >= cand and dim % cand == 0:
            return cand
    return dim


def pallas_linear(x2d, w, b, *, compute_dtype=jnp.bfloat16,
                  out_dtype=jnp.bfloat16,
                  tm_target=512, tn_target=512, tk_target=512):
    """x2d: (M, K), w: (K, Nout) (ideally already bf16), b: (1, Nout) f32."""
    M, K = x2d.shape
    Nout = w.shape[1]

    tm = _choose_tile(M, tm_target)
    tn = _choose_tile(Nout, tn_target)
    tk = _choose_tile(K, tk_target)

    # casts are no-ops when inputs are already in compute_dtype (weights pre-cast)
    x2d = x2d.astype(compute_dtype)
    w = w.astype(compute_dtype)
    b = b.astype(jnp.float32)

    grid = (M // tm, Nout // tn, K // tk)

    return pl.pallas_call(
        _linear_kernel,
        out_shape=jax.ShapeDtypeStruct((M, Nout), out_dtype),
        grid_spec=pltpu.PrefetchScalarGridSpec(
            num_scalar_prefetch=0,
            grid=grid,
            in_specs=[
                pl.BlockSpec((tm, tk), lambda i, j, k: (i, k)),
                pl.BlockSpec((tk, tn), lambda i, j, k: (k, j)),
                pl.BlockSpec((1, tn), lambda i, j, k: (0, j)),
            ],
            out_specs=pl.BlockSpec((tm, tn), lambda i, j, k: (i, j)),
            scratch_shapes=[pltpu.VMEM((tm, tn), jnp.float32)],
        ),
        compiler_params=pltpu.CompilerParams(
            dimension_semantics=("parallel", "parallel", "arbitrary")
        ),
    )(x2d, w, b)


# ---------------------------------------------------------------------------
# Kernel 2: fused multi-head attention + output projection.
#   input : qkv block (Bb, N, 3C)  (q | k | v contiguous column blocks,
#           head h of q at columns [h*hd, (h+1)*hd), matching torch's
#           reshape(B, N, 3, H, hd) semantics), resident W_proj (C, C) bf16,
#           b_proj (1, C) f32.
#   output: (Bb, N, C) f32, heads merged and projected, one dense store/batch.
# ---------------------------------------------------------------------------
def _attn_proj_kernel(qkv_ref, wproj_ref, bproj_ref, o_ref, *,
                      num_heads, scale, kv_chunk):
    Bb, N, C3 = qkv_ref.shape
    C = C3 // 3
    hd = C // num_heads

    # hoist the resident projection weights out of the batch/head loops
    w_proj = wproj_ref[...]          # (C, C) bf16
    b_proj = bproj_ref[...]          # (1, C) f32

    for bb in range(Bb):
        # lane-dense slabs (offsets 0 / C / 2C; C is a multiple of 128 in real
        # UniFormer configs)
        q_all = qkv_ref[bb, :, 0:C]              # (N, C) bf16
        k_all = qkv_ref[bb, :, C:2 * C]
        v_all = qkv_ref[bb, :, 2 * C:3 * C]

        head_outs = []
        for h in range(num_heads):
            lo, hi = h * hd, (h + 1) * hd
            # fold the softmax scale into q: N*hd multiplies instead of N*N
            qh = q_all[:, lo:hi] * scale          # (N, hd) bf16

            # KV-chunked online softmax (single chunk for UniFormer-sized N)
            m_i = jnp.full((N, 1), -jnp.inf, dtype=jnp.float32)
            l_i = jnp.zeros((N, 1), dtype=jnp.float32)
            acc = jnp.zeros((N, hd), dtype=jnp.float32)

            for c0 in range(0, N, kv_chunk):
                kc = k_all[c0:c0 + kv_chunk, lo:hi]        # (kc, hd) bf16
                vc = v_all[c0:c0 + kv_chunk, lo:hi]
                # scores: contract last dims directly (no k.T materialization)
                s = jax.lax.dot_general(
                    qh, kc,
                    dimension_numbers=(((1,), (1,)), ((), ())),
                    preferred_element_type=jnp.float32,
                )                                          # (N, kc) f32
                m_new = jnp.maximum(m_i, jnp.max(s, axis=-1, keepdims=True))
                alpha = jnp.exp(m_i - m_new)               # f32 (portable to v5e)
                p = jnp.exp(s - m_new)                     # unnormalized probs
                l_i = alpha * l_i + jnp.sum(p, axis=-1, keepdims=True)
                acc = alpha * acc + jnp.dot(
                    p.astype(vc.dtype), vc, preferred_element_type=jnp.float32
                )
                m_i = m_new

            # deferred normalization: scale the (N, hd) accumulator, not (N, N)
            oh = acc * pl.reciprocal(l_i, approx=True)
            head_outs.append(oh.astype(q_all.dtype))

        # merge heads into one lane-dense (N, C) tile, fused output projection,
        # single dense store per batch element.
        o_b = jnp.concatenate(head_outs, axis=-1)          # (N, C) bf16
        o_b = jnp.dot(o_b, w_proj, preferred_element_type=jnp.float32) + b_proj
        o_ref[bb, :, :] = o_b.astype(o_ref.dtype)


def _choose_kv_chunk(N):
    for cand in (512, 256, 128):
        if N > cand and N % cand == 0:
            return cand
    return N


def _choose_batch_block(B, N, C, budget_bytes=16 * 2**20):
    """Largest divisor of B whose double-buffered blocks fit the budget while
    keeping the parallel grid axis >= 2 (so v7x can split across its 2 TCs)."""
    per_batch = 2 * (N * 3 * C * 2) + 2 * (N * C * 4)   # bf16 in + f32 out
    bb = 1
    for cand in range(1, B + 1):
        if B % cand != 0:
            continue
        if cand * per_batch > budget_bytes:
            continue
        if B >= 2 and B // cand < 2:
            continue
        bb = cand
    return bb


def pallas_attention_proj(qkv, w_proj, b_proj, *, num_heads, scale,
                          out_dtype=jnp.float32):
    """qkv: (B, N, 3C) bf16 -> (B, N, C) out_dtype (heads merged + projected)."""
    B, N, C3 = qkv.shape
    C = C3 // 3
    hd = C // num_heads
    kv_chunk = _choose_kv_chunk(N)
    Bb = _choose_batch_block(B, N, C)

    # explicit VMEM budget (scoped default is only 16 MiB on v5e / 32 MiB on
    # v6e+v7x): double-buffered blocks + resident W_proj + live temporaries,
    # 2x headroom, clamped to stay under v7x's 64 MiB physical VMEM.
    est = (2 * Bb * N * 3 * C * 2            # qkv input block, bf16, 2 buffers
           + 2 * Bb * N * C * 4              # output block, f32, 2 buffers
           + 2 * (C * C * 2 + C * 4)         # W_proj / b_proj
           + 3 * N * C * 2                   # q/k/v slabs
           + 3 * N * kv_chunk * 4            # scores + exp temporaries
           + 2 * N * hd * 4                  # online-softmax accumulator
           + 2 * N * C * 4)                  # merged heads + proj result
    vmem_limit = int(min(max(2 * est, 32 * 2**20), 56 * 2**20))

    w_proj = w_proj.astype(qkv.dtype)        # no-op when pre-cast to bf16
    b_proj = b_proj.astype(jnp.float32)

    return pl.pallas_call(
        partial(_attn_proj_kernel, num_heads=num_heads, scale=scale,
                kv_chunk=kv_chunk),
        out_shape=jax.ShapeDtypeStruct((B, N, C), out_dtype),
        grid=(B // Bb,),
        in_specs=[
            pl.BlockSpec((Bb, N, C3), lambda b: (b, 0, 0)),
            pl.BlockSpec((C, C), lambda b: (0, 0)),
            pl.BlockSpec((1, C), lambda b: (0, 0)),
        ],
        out_specs=pl.BlockSpec((Bb, N, C), lambda b: (b, 0, 0)),
        compiler_params=pltpu.CompilerParams(
            dimension_semantics=("parallel",),
            vmem_limit_bytes=vmem_limit,
        ),
    )(qkv, w_proj, b_proj)


# ---------------------------------------------------------------------------
# Full forward pass: qkv linear -> fused attention + output projection.
# Only free reshapes between the two pallas_calls (no XLA transposes).
# ---------------------------------------------------------------------------
def prepare_params(params, compute_dtype=jnp.bfloat16):
    """Hoist weight casts out of the per-forward path (store weights in bf16)."""
    return {
        "w_qkv": params["w_qkv"].astype(compute_dtype),
        "b_qkv": params["b_qkv"].astype(jnp.float32),
        "w_proj": params["w_proj"].astype(compute_dtype),
        "b_proj": params["b_proj"].astype(jnp.float32),
    }


def attention_forward(x, params, num_heads, compute_dtype=jnp.bfloat16):
    B, N, C = x.shape
    hd = C // num_heads
    scale = hd ** -0.5

    x2d = x.reshape(B * N, C).astype(compute_dtype)   # single cast pass over x

    # qkv projection: (B*N, C) @ (C, 3C) + b, output kept bf16
    qkv2d = pallas_linear(x2d, params["w_qkv"], params["b_qkv"],
                          compute_dtype=compute_dtype, out_dtype=compute_dtype)
    qkv = qkv2d.reshape(B, N, 3 * C)                  # free reshape

    # fused attention + output projection, final f32 result
    out = pallas_attention_proj(qkv, params["w_proj"], params["b_proj"],
                                num_heads=num_heads, scale=scale,
                                out_dtype=jnp.float32)
    return out


# ---------------------------------------------------------------------------
# Pure-JAX f32 reference for correctness check
# ---------------------------------------------------------------------------
def attention_reference(x, params, num_heads):
    B, N, C = x.shape
    hd = C // num_heads
    scale = hd ** -0.5
    qkv = x @ params["w_qkv"] + params["b_qkv"]
    qkv = qkv.reshape(B, N, 3, num_heads, hd).transpose(2, 0, 3, 1, 4)
    q, k, v = qkv[0], qkv[1], qkv[2]
    attn = jnp.einsum("bhqd,bhkd->bhqk", q, k) * scale
    attn = jax.nn.softmax(attn, axis=-1)
    o = jnp.einsum("bhqk,bhkd->bhqd", attn, v)
    o = o.transpose(0, 2, 1, 3).reshape(B, N, C)
    return o @ params["w_proj"] + params["b_proj"]


if __name__ == "__main__":
    # Small, module-consistent shapes: B=2, N=16 tokens, C=128 channels, 8 heads
    # (head_dim=16; real UniFormer stages use C in {64,128,320,512}).
    B, N, C, num_heads = 2, 16, 128, 8

    key = jax.random.PRNGKey(0)
    kx, kqkv, kproj, kbp = jax.random.split(key, 4)

    x = jax.random.normal(kx, (B, N, C), dtype=jnp.float32)

    params = {
        # qkv Linear: dim -> 3*dim, qkv_bias=False (bias identically zero)
        "w_qkv": jax.random.normal(kqkv, (C, 3 * C), dtype=jnp.float32) * 0.02,
        "b_qkv": jnp.zeros((1, 3 * C), dtype=jnp.float32),
        # proj Linear: dim -> dim, with bias
        "w_proj": jax.random.normal(kproj, (C, C), dtype=jnp.float32) * 0.02,
        "b_proj": jax.random.normal(kbp, (1, C), dtype=jnp.float32) * 0.02,
    }

    # weights are cast to bf16 once (not per pallas_call)
    params_dev = prepare_params(params)

    out = attention_forward(x, params_dev, num_heads)
    out = jax.block_until_ready(out)

    ref = attention_reference(x, params, num_heads)
    assert out.shape == (B, N, C)
    # bf16 MXU operands (f32 accumulation) + approx reciprocal -> ~1e-3 level error
    max_err = float(jnp.max(jnp.abs(out - ref)))
    assert jnp.allclose(out, ref, atol=2e-2, rtol=2e-2), (
        f"mismatch vs JAX reference: max abs diff = {max_err}")

    print("KERNEL_OK")
</pallas_src>

<mosaic_0001>
module attributes {stable_mosaic.version = 11 : i64} {
  func.func @_linear_kernel(%arg0: i32, %arg1: i32, %arg2: i32, %arg3: memref<32x128xbf16, #tpu.memory_space<vmem>>, %arg4: memref<128x128xbf16, #tpu.memory_space<vmem>>, %arg5: memref<1x128xf32, #tpu.memory_space<vmem>>, %arg6: memref<32x128xbf16, #tpu.memory_space<vmem>>, %arg7: memref<32x128xf32, #tpu.memory_space<vmem>>) attributes {dimension_semantics = [#tpu.dimension_semantics<parallel>, #tpu.dimension_semantics<parallel>, #tpu.dimension_semantics<arbitrary>], iteration_bounds = array<i64: 1, 3, 1>, scalar_prefetch = 0 : i64, scratch_operands = 1 : i64, tpu.core_type = #tpu.core_type<tc>, window_params = [{transform_indices = @transform_0, window_bounds = array<i64: 32, 128>}, {transform_indices = @transform_1, window_bounds = array<i64: 128, 128>}, {transform_indices = @transform_2, window_bounds = array<i64: 1, 128>}, {transform_indices = @transform_3, window_bounds = array<i64: 32, 128>}]} {
    %c0_i32 = arith.constant 0 : i32
    %0 = arith.cmpi eq, %arg2, %c0_i32 : i32
    %1 = arith.extui %0 : i1 to i32
    %c0_i32_0 = arith.constant 0 : i32
    %2 = arith.cmpi ne, %1, %c0_i32_0 : i32
    scf.if %2 {
      %cst_10 = arith.constant 0.000000e+00 : f32
      %12 = vector.broadcast %cst_10 : f32 to vector<32x128xf32>
      %c0_11 = arith.constant 0 : index
      %c0_12 = arith.constant 0 : index
      %13 = vector.load %arg7[%c0_11, %c0_12] : memref<32x128xf32, #tpu.memory_space<vmem>>, vector<32x128xf32>
      tpu.vector_store %arg7[%c0_11, %c0_12], %12 {strides = array<i32>} : memref<32x128xf32, #tpu.memory_space<vmem>>, vector<32x128xf32>,
    } else {
    }
    %c0 = arith.constant 0 : index
    %c0_1 = arith.constant 0 : index
    %3 = vector.load %arg7[%c0, %c0_1] : memref<32x128xf32, #tpu.memory_space<vmem>>, vector<32x128xf32>
    %c0_2 = arith.constant 0 : index
    %c0_3 = arith.constant 0 : index
    %4 = vector.load %arg3[%c0_2, %c0_3] : memref<32x128xbf16, #tpu.memory_space<vmem>>, vector<32x128xbf16>
    %c0_4 = arith.constant 0 : index
    %c0_5 = arith.constant 0 : index
    %5 = vector.load %arg4[%c0_4, %c0_5] : memref<128x128xbf16, #tpu.memory_space<vmem>>, vector<128x128xbf16>
    %cst = arith.constant dense<0.000000e+00> : vector<32x128xf32>
    %6 = tpu.matmul %4, %5, %cst {dimension_numbers = #tpu.dot_dimension_numbers<[1], [0], [0], [1], [0, 0, 1, 1], [], []>} : vector<32x128xbf16>, vector<128x128xbf16>, vector<32x128xf32> -> vector<32x128xf32>
    %7 = arith.addf %3, %6 : vector<32x128xf32>
    %c0_6 = arith.constant 0 : index
    %c0_7 = arith.constant 0 : index
    %8 = vector.load %arg7[%c0_6, %c0_7] : memref<32x128xf32, #tpu.memory_space<vmem>>, vector<32x128xf32>
    tpu.vector_store %arg7[%c0_6, %c0_7], %7 {strides = array<i32>} : memref<32x128xf32, #tpu.memory_space<vmem>>, vector<32x128xf32>,
    %c0_i32_8 = arith.constant 0 : i32
    %9 = arith.cmpi eq, %arg2, %c0_i32_8 : i32
    %10 = arith.extui %9 : i1 to i32
    %c0_i32_9 = arith.constant 0 : i32
    %11 = arith.cmpi ne, %10, %c0_i32_9 : i32
    scf.if %11 {
      %c0_10 = arith.constant 0 : index
      %c0_11 = arith.constant 0 : index
      %12 = vector.load %arg7[%c0_10, %c0_11] : memref<32x128xf32, #tpu.memory_space<vmem>>, vector<32x128xf32>
      %c0_12 = arith.constant 0 : index
      %c0_13 = arith.constant 0 : index
      %13 = vector.load %arg5[%c0_12, %c0_13] : memref<1x128xf32, #tpu.memory_space<vmem>>, vector<1x128xf32>
      %14 = vector.broadcast %13 : vector<1x128xf32> to vector<32x128xf32>
      %15 = arith.addf %12, %14 : vector<32x128xf32>
      %16 = arith.truncf %15 : vector<32x128xf32> to vector<32x128xbf16>
      %c0_14 = arith.constant 0 : index
      %c0_15 = arith.constant 0 : index
      %17 = vector.load %arg6[%c0_14, %c0_15] : memref<32x128xbf16, #tpu.memory_space<vmem>>, vector<32x128xbf16>
      tpu.vector_store %arg6[%c0_14, %c0_15], %16 {strides = array<i32>} : memref<32x128xbf16, #tpu.memory_space<vmem>>, vector<32x128xbf16>,
    } else {
    }
    return
  }
  func.func @transform_0(%arg0: i32, %arg1: i32, %arg2: i32) -> (i32, i32) {
    %c0_i32 = arith.constant 0 : i32
    return %arg0, %arg2 : i32, i32
  }
  func.func @transform_1(%arg0: i32, %arg1: i32, %arg2: i32) -> (i32, i32) {
    %c0_i32 = arith.constant 0 : i32
    return %arg2, %arg1 : i32, i32
  }
  func.func @transform_2(%arg0: i32, %arg1: i32, %arg2: i32) -> (i32, i32) {
    %c0_i32 = arith.constant 0 : i32
    %c0_i32_0 = arith.constant 0 : i32
    return %c0_i32, %arg1 : i32, i32
  }
  func.func @transform_3(%arg0: i32, %arg1: i32, %arg2: i32) -> (i32, i32) {
    %c0_i32 = arith.constant 0 : i32
    return %arg0, %arg1 : i32, i32
  }
}

</mosaic_0001>

<llo_original>
// kernel: tpu_custom_call.1
$region0: #{tpu_custom_call.1}
  #allocation0 [shape = 'u32[]', space=smem, size = 0x4, offset = 0x4, fixed_abs, tag = 'smem constant byte address 0x4 - core index']
  #allocation1 [shape = 'u32[144,128]{1,0:T(1,128)}', space=vmem, size = 0x12000, scoped, tag = 'internal scratch']
  #allocation2 [shape = 'f32[32,128]{1,0:T(8,128)}', space=vmem, size = 0x4000, scoped, tag = 'scratch operand']
  %s0 = inlined_call_operand.hbm [shape: bf16[32,128], index: 0, kind: input, shape index: {}]
  %s1 = inlined_call_operand.hbm [shape: bf16[128,384], index: 1, kind: input, shape index: {}]
  %s2 = inlined_call_operand.vmem [shape: f32[1,384], index: 2, kind: input, shape index: {}]
  %s3 = inlined_call_operand.hbm [shape: bf16[32,384], index: 3, kind: output, shape index: {}]
  %s4 = sld [smem:[#allocation0]]
  $region61: #{tpu_custom_call.1} parent=0
    _
  %s6 = ssub.s32 1, %s4
  %s7 = scalar_select 0, %s6, %s4
  $region1: #{tpu_custom_call.1} parent=0
    #allocation3 [shape = 'u8[8192]{0}', space=vmem, size = 0x2000, scoped, tag = 'input window, operand 0, single buffered']
    #allocation4 [shape = 's32[2]{0}', space=sflag, size = 0x8, scoped, tag = 'scoped memory for tpu_custom_call.1']
    #allocation5 [shape = 's32[2]{0}', space=sflag, size = 0x8, scoped, tag = 'scoped memory for tpu_custom_call.1']
    #allocation6 [shape = 'u8[65536]{0}', space=vmem, size = 0x10000, scoped, tag = 'input window, operand 1']
    #allocation7 [shape = 's32[2]{0}', space=sflag, size = 0x8, scoped, tag = 'scoped memory for tpu_custom_call.1']
    #allocation8 [shape = 'u8[16384]{0}', space=vmem, size = 0x4000, scoped, tag = 'output window, operand 0']
    %8 = vsyncpa [#allocation4], 0
    %9 = vsyncpa [#allocation7], 0
    %s10 = scalar_lea.sflag [#allocation7], 1
    %11 = vsyncpa %s10, 0
    %12 = vsyncpa [#allocation5], 0
    %s13 = scalar_lea.sflag [#allocation5], 1
    %14 = vsyncpa %s13, 0
    loop: start=0, step=1, limit=5
    $region2: #{tpu_custom_call.1} parent=1 // loop_pre_header
      _
    $region3: #{tpu_custom_call.1} parent=1 // loop_header
      %s16 = sphi 0, %s20
      %p17 = scmp.ge.s32.totalorder %s16, 5
      %s23 = sphi 0, %s42
      %s24 = sphi 0, %s38
      %s25 = sphi 0, %s34
      %s26 = sphi 0, %s23
      %s27 = sphi 0, %s24
      %s28 = sphi 0, %s25
      %s29 = sphi 0, %s26
      %s30 = sphi 0, %s27
      %s31 = sphi 0, %s28
      %s47 = sphi 0, %s49
      %s50 = sphi 0, %s47
      %s51 = sphi 0, %s50
      %s67 = sphi 0, %s51
      %s75 = sphi 0, %s77
      %s78 = sphi 0, %s75
      %s79 = sphi 0, %s78
      %s95 = sphi 0, %s79
      %s101 = sphi 0, %s103
      %s104 = sphi 0, %s101
      %s105 = sphi 0, %s104
      %s121 = sphi 0, %s105
      %s129 = sphi 0, %s131
      %s132 = sphi 0, %s129
      %s133 = sphi 0, %s132
      %s149 = sphi 0, %s133
    $region4: #{tpu_custom_call.1} parent=1 // loop_header_branch
      %19 = sbr.rel (%p17) target = $region8
    $region5: #{tpu_custom_call.1} parent=1 // loop_body
      %s21 = ssub.s32 %s16, 1
      %s22 = ssub.s32 %s16, 2
      %s32 = sadd.s32 1, %s25
      %p33 = scmp.ge.s32.totalorder %s32, 1
      %s34 = scalar_select %p33, 0, %s32
      %s35 = sadd.s32 1, %s24
      %s36 = scalar_select %p33, %s35, %s24
      %p37 = scmp.ge.s32.totalorder %s36, 3
      %s38 = scalar_select %p37, 0, %s36
      %s39 = sadd.s32 1, %s23
      %s40 = scalar_select %p37, %s39, %s23
      %p41 = scmp.ge.s32.totalorder %s40, 1
      %s42 = scalar_select %p41, 0, %s40
      %s43 = ssub.s32 %s23, %s42
      %s44 = ssub.s32 %s25, %s34
      %s45 = sor.u32 %s43, %s44
      %p46 = scmp.eq.s32.totalorder %s45, 0
      %s48 = sadd.s32 %s47, 1
      %s49 = scalar_select %p46, %s47, %s48
      %p52 = pneg %p46
      %p53 = scmp.eq.s32.totalorder %s16, 2
      %p54 = por %p52, %p53
      %p55 = scmp.ne.s32.totalorder %s47, %s50
      %p56 = scmp.eq.s32.totalorder %s16, 0
      %p57 = por %p55, %p56
      %p58 = scmp.ne.s32.totalorder %s47, %s50
      %p59 = scmp.eq.s32.totalorder %s21, 2
      %p60 = por %p58, %p59
      %p61 = scmp.ne.s32.totalorder %s50, %s51
      %p62 = scmp.eq.s32.totalorder %s21, 0
      %p63 = por %p61, %p62
      %p64 = scmp.ne.s32.totalorder %s50, %s51
      %p65 = scmp.eq.s32.totalorder %s22, 2
      %p66 = por %p64, %p65
      %p68 = scmp.ne.s32.totalorder %s51, %s67
      %p69 = scmp.eq.s32.totalorder %s22, 0
      %p70 = por %p68, %p69
      %s71 = ssub.s32 %s25, %s34
      %s72 = ssub.s32 %s24, %s38
      %s73 = sor.u32 %s71, %s72
      %p74 = scmp.eq.s32.totalorder %s73, 0
      %s76 = sadd.s32 %s75, 1
      %s77 = scalar_select %p74, %s75, %s76
      %p80 = pneg %p74
      %p81 = scmp.eq.s32.totalorder %s16, 2
      %p82 = por %p80, %p81
      %p83 = scmp.ne.s32.totalorder %s75, %s78
      %p84 = scmp.eq.s32.totalorder %s16, 0
      %p85 = por %p83, %p84
      %p86 = scmp.ne.s32.totalorder %s75, %s78
      %p87 = scmp.eq.s32.totalorder %s21, 2
      %p88 = por %p86, %p87
      %p89 = scmp.ne.s32.totalorder %s78, %s79
      %p90 = scmp.eq.s32.totalorder %s21, 0
      %p91 = por %p89, %p90
      %p92 = scmp.ne.s32.totalorder %s78, %s79
      %p93 = scmp.eq.s32.totalorder %s22, 2
      %p94 = por %p92, %p93
      %p96 = scmp.ne.s32.totalorder %s79, %s95
      %p97 = scmp.eq.s32.totalorder %s22, 0
      %p98 = por %p96, %p97
      %s99 = ssub.s32 %s24, %s38
      %p100 = scmp.eq.s32.totalorder %s99, 0
      %s102 = sadd.s32 %s101, 1
      %s103 = scalar_select %p100, %s101, %s102
      %p106 = pneg %p100
      %p107 = scmp.eq.s32.totalorder %s16, 2
      %p108 = por %p106, %p107
      %p109 = scmp.ne.s32.totalorder %s101, %s104
      %p110 = scmp.eq.s32.totalorder %s16, 0
      %p111 = por %p109, %p110
      %p112 = scmp.ne.s32.totalorder %s101, %s104
      %p113 = scmp.eq.s32.totalorder %s21, 2
      %p114 = por %p112, %p113
      %p115 = scmp.ne.s32.totalorder %s104, %s105
      %p116 = scmp.eq.s32.totalorder %s21, 0
      %p117 = por %p115, %p116
      %p118 = scmp.ne.s32.totalorder %s104, %s105
      %p119 = scmp.eq.s32.totalorder %s22, 2
      %p120 = por %p118, %p119
      %p122 = scmp.ne.s32.totalorder %s105, %s121
      %p123 = scmp.eq.s32.totalorder %s22, 0
      %p124 = por %p122, %p123
      %s125 = ssub.s32 %s23, %s42
      %s126 = ssub.s32 %s24, %s38
      %s127 = sor.u32 %s125, %s126
      %p128 = scmp.eq.s32.totalorder %s127, 0
      %s130 = sadd.s32 %s129, 1
      %s131 = scalar_select %p128, %s129, %s130
      %p134 = pneg %p128
      %p135 = scmp.eq.s32.totalorder %s16, 2
      %p136 = por %p134, %p135
      %p137 = scmp.ne.s32.totalorder %s129, %s132
      %p138 = scmp.eq.s32.totalorder %s16, 0
      %p139 = por %p137, %p138
      %p140 = scmp.ne.s32.totalorder %s129, %s132
      %p141 = scmp.eq.s32.totalorder %s21, 2
      %p142 = por %p140, %p141
      %p143 = scmp.ne.s32.totalorder %s132, %s133
      %p144 = scmp.eq.s32.totalorder %s21, 0
      %p145 = por %p143, %p144
      %p146 = scmp.ne.s32.totalorder %s132, %s133
      %p147 = scmp.eq.s32.totalorder %s22, 2
      %p148 = por %p146, %p147
      %p150 = scmp.ne.s32.totalorder %s133, %s149
      %p151 = scmp.eq.s32.totalorder %s22, 0
      %p152 = por %p150, %p151
      %p153 = scmp.le.s32.totalorder 1, %s16
      %p154 = scmp.lt.s32.totalorder %s16, 4
      %p155 = pnand %p153, %p154
      %p156 = pneg %p155
      // Predicated region
      $region9: #{tpu_custom_call.1} parent=5 // pred_check
        _
      $region10: #{tpu_custom_call.1} parent=5 // pred_check_branch
        %158 = sbr.rel (%p155) target = $region12
      $region11: #{tpu_custom_call.1} parent=5 // pred_region
        %s159 = ssub.s32 %s16, 1
        // Predicated region
        $region13: #{tpu_custom_call.1} parent=11 // pred_check
          %p160 = pneg %p63
        $region14: #{tpu_custom_call.1} parent=11 // pred_check_branch
          %162 = sbr.rel (%p160) target = $region16
        $region15: #{tpu_custom_call.1} parent=11 // pred_region
          %s163 = smul.u32 4, %s26
          %s165 = ssub.s32 256, 256
          %166 = vsyncadd [#allocation4], %s165
          %s167 = sadd.s32 %s28, %s163
          %s168 = smul.addr %s167, 64
          %s169 = scalar_lea.hbm %s0, %s168
          %s170 = sshll.u32 [#allocation3], 4
          %s171 = int_to_ptr.vmem [resolvable:$true] %s170
          %176 = dma.hbm_to_vmem [thread:$0]  %s169, 256, %s171, [#allocation4], 64, 64, 4
        $region16: #{tpu_custom_call.1} parent=11 // pred_fallthru
          _
      $region12: #{tpu_custom_call.1} parent=5 // pred_fallthru
        _
      %p177 = scmp.lt.s32.totalorder %s16, 3
      // Predicated region
      $region17: #{tpu_custom_call.1} parent=5 // pred_check
        %p178 = pneg %p177
      $region18: #{tpu_custom_call.1} parent=5 // pred_check_branch
        %180 = sbr.rel (%p178) target = $region20
      $region19: #{tpu_custom_call.1} parent=5 // pred_region
        // Predicated region
        $region21: #{tpu_custom_call.1} parent=19 // pred_check
          %p181 = pneg %p85
        $region22: #{tpu_custom_call.1} parent=19 // pred_check_branch
          %183 = sbr.rel (%p181) target = $region24
        $region23: #{tpu_custom_call.1} parent=19 // pred_region
          %s184 = sand.u32 %s75, 1
          %s185 = scalar_lea.sflag [#allocation7], %s184
          %s186 = sand.u32 %s75, 1
          %s187 = smul.addr %s186, 64
          %s188 = scalar_lea.vmem [#allocation6], %s187
          %s189 = smul.u32 16, %s25
          %s191 = ssub.s32 1024, 1024
          %192 = vsyncadd %s185, %s191
          %s193 = smul.addr %s189, 3
          %s194 = sadd.s32 %s24, %s193
          %s195 = smul.addr %s194, 64
          %s196 = scalar_lea.hbm %s1, %s195
          %s197 = sshll.u32 %s188, 4
          %s198 = int_to_ptr.vmem [resolvable:$true] %s197
          %203 = dma.hbm_to_vmem [thread:$0]  %s196, 1024, %s198, %s185, 192, 64, 4
        $region24: #{tpu_custom_call.1} parent=19 // pred_fallthru
          _
        // Predicated region
        $region25: #{tpu_custom_call.1} parent=19 // pred_check
          %p204 = pneg %p111
        $region26: #{tpu_custom_call.1} parent=19 // pred_check_branch
          %206 = sbr.rel (%p204) target = $region28
        $region27: #{tpu_custom_call.1} parent=19 // pred_region
          %p207 = scmp.lt.s32.totalorder %s24, 2
          %s208 = scalar_select %p207, %s24, 2
          %s209 = scalar_lea.vmem %s2, %s208
        $region28: #{tpu_custom_call.1} parent=19 // pred_fallthru
          _
      $region20: #{tpu_custom_call.1} parent=5 // pred_fallthru
        _
      %p210 = scmp.le.s32.totalorder 1, %s16
      %p211 = scmp.lt.s32.totalorder %s16, 4
      %p212 = pnand %p210, %p211
      %p213 = pneg %p212
      // Predicated region
      $region29: #{tpu_custom_call.1} parent=5 // pred_check
        _
      $region30: #{tpu_custom_call.1} parent=5 // pred_check_branch
        %215 = sbr.rel (%p212) target = $region32
      $region31: #{tpu_custom_call.1} parent=5 // pred_region
        %s216 = ssub.s32 %s16, 1
        // Predicated region
        $region33: #{tpu_custom_call.1} parent=31 // pred_check
          %p217 = pneg %p63
        $region34: #{tpu_custom_call.1} parent=31 // pred_check_branch
          %219 = sbr.rel (%p217) target = $region36
        $region35: #{tpu_custom_call.1} parent=31 // pred_region
          %220 = dma.done [#allocation4], 256
        $region36: #{tpu_custom_call.1} parent=31 // pred_fallthru
          _
        %s221 = sand.u32 %s78, 1
        %s222 = scalar_lea.sflag [#allocation7], %s221
        %s223 = sand.u32 %s78, 1
        %s224 = smul.addr %s223, 64
        %s225 = scalar_lea.vmem [#allocation6], %s224
        // Predicated region
        $region37: #{tpu_custom_call.1} parent=31 // pred_check
          %p226 = pneg %p91
        $region38: #{tpu_custom_call.1} parent=31 // pred_check_branch
          %228 = sbr.rel (%p226) target = $region40
        $region39: #{tpu_custom_call.1} parent=31 // pred_region
          %229 = dma.done %s222, 1024
        $region40: #{tpu_custom_call.1} parent=31 // pred_fallthru
          _
        %p230 = pneg %p63
        %p231 = pneg %p60
        %s232 = sand.u32 %s78, 1
        %s233 = scalar_lea.sflag [#allocation7], %s232
        %s234 = sand.u32 %s78, 1
        %s235 = smul.addr %s234, 64
        %s236 = scalar_lea.vmem [#allocation6], %s235
        %p237 = pneg %p91
        %p238 = pneg %p88
        %p239 = scmp.lt.s32.totalorder %s27, 2
        %s240 = scalar_select %p239, %s27, 2
        %s241 = scalar_lea.vmem %s2, %s240
        %p242 = pneg %p117
        %p243 = pneg %p114
        %p244 = pneg %p145
        %p245 = pneg %p142
        %s246 = sand.u32 %s132, 1
        %s247 = scalar_lea.sflag [#allocation5], %s246
        %s248 = sand.u32 %s132, 1
        %s249 = smul.addr %s248, 16
        %s250 = scalar_lea.vmem [#allocation8], %s249
        %s251 = smul.u32 4, %s26
        %s252 = smul.u32 16, %s28
        %p253 = scmp.lt.s32.totalorder %s27, 2
        %s254 = scalar_select %p253, %s27, 2
        %s255 = scalar_lea.vmem %s2, %s254
        %s256 = smul.u32 4, %s26
        %p258 = scmp.eq.s32.totalorder %s28, 0
        // Predicated region
        $region41: #{tpu_custom_call.1} parent=31 // pred_check
          %p259 = pneg %p258
        $region42: #{tpu_custom_call.1} parent=31 // pred_check_branch
          %261 = sbr.rel (%p259) target = $region44
        $region43: #{tpu_custom_call.1} parent=31 // pred_region
          %262 = vst [vmem:[#allocation2] sm:$0xff] 0.0
          %263 = vst [vmem:[#allocation2 + $0x8] sm:$0xff] 0.0
          %264 = vst [vmem:[#allocation2 + $0x10] sm:$0xff] 0.0
          %265 = vst [vmem:[#allocation2 + $0x18] sm:$0xff] 0.0
        $region44: #{tpu_custom_call.1} parent=31 // pred_fallthru
          _
        %v266 = vld [vmem:[#allocation2] sm:$0xff]
        %v267 = vld [vmem:[#allocation2 + $0x8] sm:$0xff]
        %v268 = vld [vmem:[#allocation2 + $0x10] sm:$0xff]
        %v269 = vld [vmem:[#allocation2 + $0x18] sm:$0xff]
        %v270 = vld [vmem:[#allocation3] sm:$0xf]
        %v271 = vld [vmem:[#allocation3 + $0x4] sm:$0xf]
        %v272 = vld [vmem:[#allocation3 + $0x8] sm:$0xf]
        %v273 = vld [vmem:[#allocation3 + $0xc] sm:$0xf]
        %v274 = vld [vmem:[%s225] sm:$0xf]
        %v275 = vld [vmem:[%s225 + $0x4] sm:$0xf]
        %v276 = vld [vmem:[%s225 + $0x8] sm:$0xf]
        %v277 = vld [vmem:[%s225 + $0xc] sm:$0xf]
        %v278 = vld [vmem:[%s225 + $0x10] sm:$0xf]
        %v279 = vld [vmem:[%s225 + $0x14] sm:$0xf]
        %v280 = vld [vmem:[%s225 + $0x18] sm:$0xf]
        %v281 = vld [vmem:[%s225 + $0x1c] sm:$0xf]
        %v282 = vld [vmem:[%s225 + $0x20] sm:$0xf]
        %v283 = vld [vmem:[%s225 + $0x24] sm:$0xf]
        %v284 = vld [vmem:[%s225 + $0x28] sm:$0xf]
        %v285 = vld [vmem:[%s225 + $0x2c] sm:$0xf]
        %v286 = vld [vmem:[%s225 + $0x30] sm:$0xf]
        %v287 = vld [vmem:[%s225 + $0x34] sm:$0xf]
        %v288 = vld [vmem:[%s225 + $0x38] sm:$0xf]
        %v289 = vld [vmem:[%s225 + $0x3c] sm:$0xf]
        %v294 = vunpack.c.l.b16 %v270
        %v295 = vunpack.c.l.b16 %v271
        %v296 = vunpack.c.l.b16 %v272
        %v297 = vunpack.c.l.b16 %v273
        %v298 = vpack.c.b16 %v295, %v294
        %v299 = vpack.c.b16 %v297, %v296
        %v318 = vunpack.c.l.b16 %v274
        %v319 = vunpack.c.l.b16 %v275
        %v320 = vunpack.c.l.b16 %v276
        %v321 = vunpack.c.l.b16 %v277
        %v322 = vunpack.c.l.b16 %v278
        %v323 = vunpack.c.l.b16 %v279
        %v324 = vunpack.c.l.b16 %v280
        %v325 = vunpack.c.l.b16 %v281
        %v326 = vunpack.c.l.b16 %v282
        %v327 = vunpack.c.l.b16 %v283
        %v328 = vunpack.c.l.b16 %v284
        %v329 = vunpack.c.l.b16 %v285
        %v330 = vunpack.c.l.b16 %v286
        %v331 = vunpack.c.l.b16 %v287
        %v332 = vunpack.c.l.b16 %v288
        %v333 = vunpack.c.l.b16 %v289
        %v334 = vpack.c.b16 %v319, %v318
        %v335 = vpack.c.b16 %v321, %v320
        %v336 = vpack.c.b16 %v323, %v322
        %v337 = vpack.c.b16 %v325, %v324
        %v338 = vpack.c.b16 %v327, %v326
        %v339 = vpack.c.b16 %v329, %v328
        %v340 = vpack.c.b16 %v331, %v330
        %v341 = vpack.c.b16 %v333, %v332
        %350 = vmatprep.subr.bf16.mxu0 0
        %351 = vmatpush1.bf16.msra.mxu0 %v334
        %352 = vmatprep.subr.bf16.mxu0 0
        %353 = vmatpush1.bf16.msra.mxu0 %v335
        %354 = vmatprep.subr.bf16.mxu0 0
        %355 = vmatpush1.bf16.msra.mxu0 %v336
        %356 = vmatprep.subr.bf16.mxu0 0
        %357 = vmatpush1.bf16.msra.mxu0 %v337
        %358 = vmatprep.subr.bf16.mxu0 0
        %359 = vmatpush1.bf16.msra.mxu0 %v338
        %360 = vmatprep.subr.bf16.mxu0 0
        %361 = vmatpush1.bf16.msra.mxu0 %v339
        %362 = vmatprep.subr.bf16.mxu0 0
        %363 = vmatpush1.bf16.msra.mxu0 %v340
        %364 = vmatprep.subr.bf16.mxu0 0
        %365 = vmatpush1.bf16.msra.mxu0 %v341
        %366 = vmatprep.subr.bf16.mxu0 0
        %367 = vmatpush1.bf16.msra.mxu0 0
        %368 = vmatprep.subr.bf16.mxu0 0
        %369 = vmatpush1.bf16.msra.mxu0 0
        %370 = vmatprep.subr.bf16.mxu0 0
        %371 = vmatpush1.bf16.msra.mxu0 0
        %372 = vmatprep.subr.bf16.mxu0 0
        %373 = vmatpush1.bf16.msra.mxu0 0
        %374 = vmatprep.subr.bf16.mxu0 0
        %375 = vmatpush1.bf16.msra.mxu0 0
        %376 = vmatprep.subr.bf16.mxu0 0
        %377 = vmatpush1.bf16.msra.mxu0 0
        %378 = vmatprep.subr.bf16.mxu0 0
        %379 = vmatpush1.bf16.msra.mxu0 0
        %380 = vmatprep.subr.bf16.mxu0 0
        %381 = vmatpush1.bf16.msra.mxu0 0
        %382 = vmatprep.mubr.bf16.mxu0 0
        %383 = vmatmul.mubr.bf16.gmra.mrb[0].mxu0 %v298
        %v384 = vpop.f32.mrb[0].mxu0
        %v385 = vadd.f32 0.0, %v384
        %v386 = vpop.f32.mrb[0].mxu0
        %v387 = vpop.f32.mrb[0].mxu0
        %v388 = vadd.f32 0.0, %v387
        %v389 = vpop.f32.mrb[0].mxu0
        %390 = vmatprep.mubr.bf16.mxu0 0
        %391 = vmatmul.mubr.bf16.gmra.mrb[0].mxu0 %v299
        %v392 = vpop.f32.mrb[0].mxu0
        %v393 = vadd.f32 0.0, %v392
        %v394 = vpop.f32.mrb[0].mxu0
        %v395 = vpop.f32.mrb[0].mxu0
        %v396 = vadd.f32 0.0, %v395
        %v397 = vpop.f32.mrb[0].mxu0
        %398 = vdwg.mxu0
        %v399 = vadd.f32 %v266, %v385
        %v400 = vadd.f32 %v267, %v388
        %v401 = vadd.f32 %v268, %v393
        %v402 = vadd.f32 %v269, %v396
        %403 = vst [vmem:[#allocation2] sm:$0xff] %v399
        %404 = vst [vmem:[#allocation2 + $0x8] sm:$0xff] %v400
        %405 = vst [vmem:[#allocation2 + $0x10] sm:$0xff] %v401
        %406 = vst [vmem:[#allocation2 + $0x18] sm:$0xff] %v402
        // Predicated region
        $region45: #{tpu_custom_call.1} parent=31 // pred_check
          %p407 = pneg %p258
        $region46: #{tpu_custom_call.1} parent=31 // pred_check_branch
          %409 = sbr.rel (%p407) target = $region48
        $region47: #{tpu_custom_call.1} parent=31 // pred_region
          %v410 = vld [vmem:[#allocation2] sm:$0xff]
          %v411 = vld [vmem:[#allocation2 + $0x8] sm:$0xff]
          %v412 = vld [vmem:[#allocation2 + $0x10] sm:$0xff]
          %v413 = vld [vmem:[#allocation2 + $0x18] sm:$0xff]
          %v414 = vld [vmem:[%s255] sm:$0x1]
          %v416 = vlaneseq
          %v417 = vshrl.u32 %v416, 7
          %v418 = vsub.s32 0, %v417
          %v419 = vrot.slane %v414, %v418
          %v421 = vadd.f32 %v410, %v419
          %v422 = vadd.f32 %v411, %v419
          %v423 = vadd.f32 %v412, %v419
          %v424 = vadd.f32 %v413, %v419
          %v425 = vpack.c.bf16 %v422, %v421
          %v426 = vpack.c.bf16 %v424, %v423
          %v429 = vunpack.c.l.b16 %v425
          %v430 = vunpack.c.h.b16 %v425
          %v431 = vunpack.c.l.b16 %v426
          %v432 = vunpack.c.h.b16 %v426
          %v433 = vpack.c.b16 %v429, %v429
          %v434 = vpack.c.b16 %v430, %v430
          %v435 = vpack.c.b16 %v431, %v431
          %v436 = vpack.c.b16 %v432, %v432
          %441 = vst [vmem:[%s250] sm:$0xf] %v433
          %442 = vst [vmem:[%s250 + $0x4] sm:$0xf] %v434
          %443 = vst [vmem:[%s250 + $0x8] sm:$0xf] %v435
          %444 = vst [vmem:[%s250 + $0xc] sm:$0xf] %v436
        $region48: #{tpu_custom_call.1} parent=31 // pred_fallthru
          _
        %s445 = sand.u32 %s132, 1
        %s446 = scalar_lea.sflag [#allocation5], %s445
        %s447 = sand.u32 %s132, 1
        %s448 = smul.addr %s447, 16
        %s449 = scalar_lea.vmem [#allocation8], %s448
        // Predicated region
        $region49: #{tpu_custom_call.1} parent=31 // pred_check
          %p450 = pneg %p142
        $region50: #{tpu_custom_call.1} parent=31 // pred_check_branch
          %452 = sbr.rel (%p450) target = $region52
        $region51: #{tpu_custom_call.1} parent=31 // pred_region
          %s453 = smul.u32 4, %s26
          %s455 = ssub.s32 256, 256
          %456 = vsyncadd %s446, %s455
          %s457 = smul.addr %s453, 3
          %s458 = sadd.s32 %s27, %s457
          %s459 = smul.addr %s458, 64
          %s460 = scalar_lea.hbm %s3, %s459
          %s461 = sshll.u32 %s449, 4
          %s462 = int_to_ptr.vmem [resolvable:$true] %s461
          %467 = dma.vmem_to_hbm [thread:$0]  %s462, 256, %s460, %s446, 64, 192, 4
        $region52: #{tpu_custom_call.1} parent=31 // pred_fallthru
          _
      $region32: #{tpu_custom_call.1} parent=5 // pred_fallthru
        _
      %p468 = scmp.le.s32.totalorder 2, %s16
      // Predicated region
      $region53: #{tpu_custom_call.1} parent=5 // pred_check
        %p469 = pneg %p468
      $region54: #{tpu_custom_call.1} parent=5 // pred_check_branch
        %471 = sbr.rel (%p469) target = $region56
      $region55: #{tpu_custom_call.1} parent=5 // pred_region
        %s472 = ssub.s32 %s16, 2
        // Predicated region
        $region57: #{tpu_custom_call.1} parent=55 // pred_check
          %p473 = pneg %p148
        $region58: #{tpu_custom_call.1} parent=55 // pred_check_branch
          %475 = sbr.rel (%p473) target = $region60
        $region59: #{tpu_custom_call.1} parent=55 // pred_region
          %s476 = sand.u32 %s133, 1
          %s477 = scalar_lea.sflag [#allocation5], %s476
          %s478 = sand.u32 %s133, 1
          %s479 = smul.addr %s478, 16
          %s480 = scalar_lea.vmem [#allocation8], %s479
          %481 = dma.done %s477, 256
        $region60: #{tpu_custom_call.1} parent=55 // pred_fallthru
          _
      $region56: #{tpu_custom_call.1} parent=5 // pred_fallthru
        _
    $region6: #{tpu_custom_call.1} parent=1 // loop_footer
      %s20 = sadd.s32 1, %s16
    $region7: #{tpu_custom_call.1} parent=1 // loop_footer_branch
      %15 = sbr.rel target = $region3
    $region8: #{tpu_custom_call.1} parent=1 // loop_exit
      _
    %482 = vsyncpa [#allocation4], 1
    %s483 = scalar_lea.sflag [#allocation4], 1
    %484 = vsyncpa %s483, 1
    %485 = vsyncpa [#allocation7], 1
    %s486 = scalar_lea.sflag [#allocation7], 1
    %487 = vsyncpa %s486, 1
    %488 = vsyncpa [#allocation5], 1
    %s489 = scalar_lea.sflag [#allocation5], 1
    %490 = vsyncpa %s489, 1

</llo_original>
